<compile_context>
chip_gen: v7x
topology: tpu7x:2x2x1
jax: 0.10.0
libtpu: 0.0.40
codegen_flags: <defaults>
</compile_context>

<pallas_src>
import math
import functools

import jax
import jax.numpy as jnp
from jax.experimental import pallas as pl
from jax.experimental.pallas import tpu as pltpu

_GELU_C = math.sqrt(2.0 / math.pi)

# Flipped to False (once) if this Pallas build rejects pipeline_mode=pl.Buffered(1).
_SINGLE_BUFFER_CONSTANTS = True


def _round_up(v, m):
    return ((v + m - 1) // m) * m


def _gelu_tanh(y):
    # Exactly the PyTorch GELU module: 0.5*x*(1+tanh(sqrt(2/pi)*(x+0.044715*x^3)))
    return 0.5 * y * (1.0 + jnp.tanh(_GELU_C * (y + 0.044715 * y * y * y)))


def _layernorm(g, gamma, beta, eps, inv_h):
    # Two-pass (centered) statistics; matches torch var(unbiased=False), eps=1e-12.
    mean = jnp.sum(g, axis=-1, keepdims=True) * inv_h
    c = g - mean
    var = jnp.sum(c * c, axis=-1, keepdims=True) * inv_h
    inv = jax.lax.rsqrt(var + eps) * gamma
    return g * inv + (beta - mean * inv)


def _fused_kernel(x_ref, w_ref, b_ref, gamma_ref, beta_ref, o_ref, *, eps, inv_h):
    # x_ref: (TM, H); w_ref: (H, H) = W^T (resident); b/gamma/beta: (1, H) f32.
    x = x_ref[...].astype(w_ref.dtype)                       # matmul dtype (bf16 fast path)
    y = jnp.dot(x, w_ref[...], preferred_element_type=jnp.float32) + b_ref[...]
    g = _gelu_tanh(y)
    o_ref[...] = _layernorm(g, gamma_ref[...], beta_ref[...], eps, inv_h).astype(o_ref.dtype)


def _fused_kernel_ksplit(x_ref, w_ref, b_ref, gamma_ref, beta_ref, o_ref, acc_ref,
                         *, eps, inv_h):
    # Grid = (row tiles, K slices); K is last and "arbitrary".  acc_ref: (TM, H) f32.
    k = pl.program_id(1)

    @pl.when(k == 0)
    def _():
        acc_ref[...] = jnp.zeros_like(acc_ref)

    acc_ref[...] += jnp.dot(x_ref[...].astype(w_ref.dtype), w_ref[...],
                            preferred_element_type=jnp.float32)

    @pl.when(k == pl.num_programs(1) - 1)
    def _():
        y = acc_ref[...] + b_ref[...]
        g = _gelu_tanh(y)
        o_ref[...] = _layernorm(g, gamma_ref[...], beta_ref[...], eps, inv_h).astype(o_ref.dtype)


def _const_block(shape, index_map, single_buffer):
    """BlockSpec for a grid-invariant operand (fetched once)."""
    if single_buffer:
        return pl.BlockSpec(shape, index_map, pipeline_mode=pl.Buffered(1))
    return pl.BlockSpec(shape, index_map)


def _vmem_capacity_bytes():
    try:
        cap = getattr(pltpu.get_tpu_info(), "vmem_capacity_bytes", None)
        if cap:
            return int(cap)
    except Exception:
        pass
    return 64 << 20  # conservative (v7x-sized) fallback


def output_layer(x, w_t, b, gamma, beta, *, eps=1e-12, tm_max=512,
                 out_dtype=None, force_k_split=False):
    """Fused Linear -> tanh-GELU -> LayerNorm.

    x:     (B, S, H) activations (f32).
    w_t:   (H, H) Linear weight, already transposed (in x out) and already in the
           desired matmul dtype.  Cast to bf16 ONCE outside any jit for the fast
           path (avoids an H*H re-cast / extra HBM traffic on every call).
    b, gamma, beta: (H,) Linear bias, LayerNorm a_2, LayerNorm b_2.
    out_dtype: optional output dtype (e.g. bf16 to halve store traffic in the
           memory-bound small-H regime); defaults to x.dtype.
    """
    global _SINGLE_BUFFER_CONSTANTS

    B, S, H = x.shape
    rows = B * S
    out_dtype = jnp.dtype(out_dtype or x.dtype)
    w_dtype = jnp.dtype(w_t.dtype)
    w_bytes = H * H * w_dtype.itemsize
    x_item = jnp.dtype(x.dtype).itemsize
    out_item = out_dtype.itemsize

    x2 = x.reshape(rows, H)
    b2 = b.reshape(1, H).astype(jnp.float32)
    gamma2 = gamma.reshape(1, H).astype(jnp.float32)
    beta2 = beta.reshape(1, H).astype(jnp.float32)

    # ---- Row tile: MXU-aligned, and >= 2 grid steps so both v7x TCs get work.
    if rows >= 2 * tm_max:
        tm = tm_max                                   # multiple of 256
    else:
        half = pl.cdiv(rows, 2)
        align = 256 if half >= 256 else (128 if half >= 128 else 8)
        tm = min(_round_up(half, align), _round_up(rows, 8))
    tm = max(8, tm)

    # ---- VMEM budget: leave headroom under the physical capacity.
    vmem_budget = int(_vmem_capacity_bytes() * 0.78)   # ~50 MiB v7x, ~100 MiB v5e/v6e

    def single_pass_bytes(tm_, w_bufs):
        return (w_bufs * w_bytes
                + 2 * tm_ * H * x_item                # double-buffered x tiles
                + 2 * tm_ * H * out_item              # double-buffered output tiles
                + 3 * tm_ * H * 4                     # in-kernel temporaries (x cast, y, g)
                + 8 * H * 4 + (2 << 20))

    use_k_split = bool(force_k_split)
    if not use_k_split and H % 128 == 0:
        use_k_split = single_pass_bytes(tm, 1) > vmem_budget
    if not use_k_split:
        while tm > 8 and single_pass_bytes(tm, 1) > vmem_budget:
            tm = max(8, _round_up(tm // 2, 8))
    grid_m = pl.cdiv(rows, tm)   # ragged last tile: OOB output rows are dropped by Pallas

    def _run(single_buffer_consts):
        if not use_k_split:
            w_bufs = 1 if single_buffer_consts else 2
            vmem_limit = min(vmem_budget,
                             max(32 << 20, int(single_pass_bytes(tm, w_bufs))))
            grid = (grid_m,)
            in_specs = [
                pl.BlockSpec((tm, H), lambda i: (i, 0)),
                _const_block((H, H), lambda i: (0, 0), single_buffer_consts),   # W^T, resident
                _const_block((1, H), lambda i: (0, 0), single_buffer_consts),   # bias
                _const_block((1, H), lambda i: (0, 0), single_buffer_consts),   # gamma (a_2)
                _const_block((1, H), lambda i: (0, 0), single_buffer_consts),   # beta  (b_2)
            ]
            out_specs = pl.BlockSpec((tm, H), lambda i: (i, 0))
            scratch = []
            kernel = functools.partial(_fused_kernel, eps=eps, inv_h=1.0 / H)
            dims = ("parallel",)
        else:
            # K-split (large H / v7x): weight sliced along the contraction dim.
            divs = [c for c in (512, 384, 256, 128) if H % c == 0]
            tk = next((c for c in divs if H // c >= 2), divs[0] if divs else H)

            def ksplit_bytes(tm_):
                return (2 * tk * H * w_dtype.itemsize     # double-buffered weight slices
                        + 2 * tm_ * tk * x_item           # double-buffered x slices
                        + 2 * tm_ * H * out_item          # double-buffered output tiles
                        + tm_ * H * 4                     # f32 accumulator scratch
                        + 3 * tm_ * H * 4                 # epilogue temporaries
                        + 8 * H * 4 + (2 << 20))

            tm_k = tm
            while tm_k > 8 and ksplit_bytes(tm_k) > vmem_budget:
                tm_k = max(8, _round_up(tm_k // 2, 8))
            vmem_limit = min(vmem_budget, max(32 << 20, int(ksplit_bytes(tm_k))))
            grid = (pl.cdiv(rows, tm_k), max(1, H // tk))
            in_specs = [
                pl.BlockSpec((tm_k, tk), lambda i, k: (i, k)),
                pl.BlockSpec((tk, H), lambda i, k: (k, 0)),
                _const_block((1, H), lambda i, k: (0, 0), single_buffer_consts),
                _const_block((1, H), lambda i, k: (0, 0), single_buffer_consts),
                _const_block((1, H), lambda i, k: (0, 0), single_buffer_consts),
            ]
            out_specs = pl.BlockSpec((tm_k, H), lambda i, k: (i, 0))
            scratch = [pltpu.VMEM((tm_k, H), jnp.float32)]
            kernel = functools.partial(_fused_kernel_ksplit, eps=eps, inv_h=1.0 / H)
            dims = ("parallel", "arbitrary")

        cost = pl.CostEstimate(
            flops=2 * rows * H * H + 14 * rows * H,
            transcendentals=rows * H,                       # tanh in GELU
            bytes_accessed=rows * H * (x_item + out_item) + w_bytes + 3 * H * 4,
        )
        return pl.pallas_call(
            kernel,
            out_shape=jax.ShapeDtypeStruct((rows, H), out_dtype),
            grid_spec=pltpu.PrefetchScalarGridSpec(
                num_scalar_prefetch=0,
                grid=grid,
                in_specs=in_specs,
                out_specs=out_specs,
                scratch_shapes=scratch,
            ),
            compiler_params=pltpu.CompilerParams(
                dimension_semantics=dims,
                vmem_limit_bytes=int(vmem_limit),
            ),
            cost_estimate=cost,
        )(x2, w_t, b2, gamma2, beta2)

    if _SINGLE_BUFFER_CONSTANTS:
        try:
            out = _run(True)
        except Exception:
            # This Pallas build rejected pl.Buffered(1); fall back (costs VMEM only).
            _SINGLE_BUFFER_CONSTANTS = False
            out = _run(False)
    else:
        out = _run(False)
    return out.reshape(B, S, H)


def _reference(x, w_t, b, gamma, beta, eps=1e-12, matmul_dtype=jnp.float32,
               precision=None):
    """Pure-JAX OutputLayer reference (PyTorch semantics), matmul in matmul_dtype."""
    y = jnp.einsum("bsh,hk->bsk",
                   x.astype(matmul_dtype), w_t.astype(matmul_dtype),
                   preferred_element_type=jnp.float32, precision=precision) + b
    g = _gelu_tanh(y)
    mean = jnp.mean(g, axis=-1, keepdims=True)
    var = jnp.mean((g - mean) ** 2, axis=-1, keepdims=True)
    inv = jax.lax.rsqrt(var + eps) * gamma
    return g * inv + (beta - mean * inv)


if __name__ == "__main__":
    key = jax.random.PRNGKey(0)
    B, S, H = 2, 8, 32

    k_x, k_w, k_b = jax.random.split(key, 3)
    x = jax.random.normal(k_x, (B, S, H), dtype=jnp.float32)

    # nn.Linear-style init: uniform(-1/sqrt(H), 1/sqrt(H)); torch weight is (out, in).
    bound = 1.0 / math.sqrt(H)
    w = jax.random.uniform(k_w, (H, H), minval=-bound, maxval=bound, dtype=jnp.float32)
    b = jax.random.uniform(k_b, (H,), minval=-bound, maxval=bound, dtype=jnp.float32)
    gamma = jnp.ones((H,), jnp.float32)     # LayerNorm a_2
    beta = jnp.zeros((H,), jnp.float32)     # LayerNorm b_2
    w_t = w.T                               # kernel computes x @ W^T

    # 1) f32 weights: parity with the original f32 PyTorch module.
    out_f32 = jax.block_until_ready(output_layer(x, w_t, b, gamma, beta))
    ref_f32 = _reference(x, w_t, b, gamma, beta,
                         matmul_dtype=jnp.float32, precision=jax.lax.Precision.HIGHEST)
    assert out_f32.shape == (B, S, H)
    assert jnp.allclose(out_f32, ref_f32, atol=2e-2, rtol=2e-2), "f32 parity mismatch"

    # 2) bf16 weights (recommended fast path; cast ONCE, outside any jit).
    w_bf16 = w_t.astype(jnp.bfloat16)
    out_bf16 = jax.block_until_ready(output_layer(x, w_bf16, b, gamma, beta))
    ref_bf16 = _reference(x, w_t, b, gamma, beta, matmul_dtype=jnp.bfloat16)
    assert jnp.allclose(out_bf16, ref_bf16, atol=2e-3, rtol=2e-3), "bf16 path mismatch"
    assert jnp.allclose(out_bf16, ref_f32, atol=5e-2, rtol=5e-2), "bf16 drift vs f32 module"

    # 3) Exercise the K-split (large-H / v7x) path on a small multiple-of-128 H.
    H2 = 256
    k_x2, k_w2, k_b2 = jax.random.split(jax.random.PRNGKey(1), 3)
    xk = jax.random.normal(k_x2, (2, 8, H2), dtype=jnp.float32)
    bound2 = 1.0 / math.sqrt(H2)
    wk = jax.random.uniform(k_w2, (H2, H2), minval=-bound2, maxval=bound2, dtype=jnp.float32)
    bk = jax.random.uniform(k_b2, (H2,), minval=-bound2, maxval=bound2, dtype=jnp.float32)
    gk = jnp.ones((H2,), jnp.float32)
    bek = jnp.zeros((H2,), jnp.float32)
    wk_bf16 = wk.T.astype(jnp.bfloat16)
    out_ks = jax.block_until_ready(
        output_layer(xk, wk_bf16, bk, gk, bek, force_k_split=True))
    ref_ks = _reference(xk, wk.T, bk, gk, bek, matmul_dtype=jnp.bfloat16)
    assert jnp.allclose(out_ks, ref_ks, atol=2e-3, rtol=2e-3), "K-split path mismatch"

    print("KERNEL_OK")
</pallas_src>

<mosaic_0001>
module attributes {stable_mosaic.version = 11 : i64} {
  func.func @_fused_kernel(%arg0: i32, %arg1: memref<8x32xf32, #tpu.memory_space<vmem>>, %arg2: memref<32x32xf32, #tpu.memory_space<vmem>>, %arg3: memref<1x32xf32, #tpu.memory_space<vmem>>, %arg4: memref<1x32xf32, #tpu.memory_space<vmem>>, %arg5: memref<1x32xf32, #tpu.memory_space<vmem>>, %arg6: memref<8x32xf32, #tpu.memory_space<vmem>>) attributes {dimension_semantics = [#tpu.dimension_semantics<parallel>], iteration_bounds = array<i64: 2>, scalar_prefetch = 0 : i64, scratch_operands = 0 : i64, tpu.core_type = #tpu.core_type<tc>, window_params = [{transform_indices = @transform_0, window_bounds = array<i64: 8, 32>}, {pipeline_mode = #tpu.pipeline_mode<synchronous>, transform_indices = @transform_1, window_bounds = array<i64: 32, 32>}, {pipeline_mode = #tpu.pipeline_mode<synchronous>, transform_indices = @transform_2, window_bounds = array<i64: 1, 32>}, {pipeline_mode = #tpu.pipeline_mode<synchronous>, transform_indices = @transform_3, window_bounds = array<i64: 1, 32>}, {pipeline_mode = #tpu.pipeline_mode<synchronous>, transform_indices = @transform_4, window_bounds = array<i64: 1, 32>}, {transform_indices = @transform_5, window_bounds = array<i64: 8, 32>}]} {
    %c0 = arith.constant 0 : index
    %c0_0 = arith.constant 0 : index
    %0 = vector.load %arg1[%c0, %c0_0] : memref<8x32xf32, #tpu.memory_space<vmem>>, vector<8x32xf32>
    %c0_1 = arith.constant 0 : index
    %c0_2 = arith.constant 0 : index
    %1 = vector.load %arg2[%c0_1, %c0_2] : memref<32x32xf32, #tpu.memory_space<vmem>>, vector<32x32xf32>
    %cst = arith.constant dense<0.000000e+00> : vector<8x32xf32>
    %2 = tpu.matmul %0, %1, %cst {dimension_numbers = #tpu.dot_dimension_numbers<[1], [0], [0], [1], [0, 0, 1, 1], [], []>} : vector<8x32xf32>, vector<32x32xf32>, vector<8x32xf32> -> vector<8x32xf32>
    %c0_3 = arith.constant 0 : index
    %c0_4 = arith.constant 0 : index
    %3 = vector.load %arg3[%c0_3, %c0_4] : memref<1x32xf32, #tpu.memory_space<vmem>>, vector<1x32xf32>
    %4 = vector.broadcast %3 : vector<1x32xf32> to vector<8x32xf32>
    %5 = arith.addf %2, %4 : vector<8x32xf32>
    %cst_5 = arith.constant 5.000000e-01 : f32
    %6 = vector.broadcast %cst_5 : f32 to vector<8x32xf32>
    %7 = arith.mulf %6, %5 : vector<8x32xf32>
    %cst_6 = arith.constant 4.471500e-02 : f32
    %8 = vector.broadcast %cst_6 : f32 to vector<8x32xf32>
    %9 = arith.mulf %8, %5 : vector<8x32xf32>
    %10 = arith.mulf %9, %5 : vector<8x32xf32>
    %11 = arith.mulf %10, %5 : vector<8x32xf32>
    %12 = arith.addf %5, %11 : vector<8x32xf32>
    %cst_7 = arith.constant 0.797884583 : f32
    %13 = vector.broadcast %cst_7 : f32 to vector<8x32xf32>
    %14 = arith.mulf %13, %12 : vector<8x32xf32>
    %15 = math.tanh %14 : vector<8x32xf32>
    %cst_8 = arith.constant 1.000000e+00 : f32
    %16 = vector.broadcast %cst_8 : f32 to vector<8x32xf32>
    %17 = arith.addf %16, %15 : vector<8x32xf32>
    %18 = arith.mulf %7, %17 : vector<8x32xf32>
    %c0_9 = arith.constant 0 : index
    %c0_10 = arith.constant 0 : index
    %19 = vector.load %arg4[%c0_9, %c0_10] : memref<1x32xf32, #tpu.memory_space<vmem>>, vector<1x32xf32>
    %c0_11 = arith.constant 0 : index
    %c0_12 = arith.constant 0 : index
    %20 = vector.load %arg5[%c0_11, %c0_12] : memref<1x32xf32, #tpu.memory_space<vmem>>, vector<1x32xf32>
    %cst_13 = arith.constant dense<0.000000e+00> : vector<8xf32>
    %21 = vector.multi_reduction <add>, %18, %cst_13 [1] : vector<8x32xf32> to vector<8xf32>
    %22 = vector.shape_cast %21 : vector<8xf32> to vector<8x1xf32>
    %cst_14 = arith.constant 3.125000e-02 : f32
    %23 = vector.broadcast %cst_14 : f32 to vector<8x1xf32>
    %24 = arith.mulf %22, %23 : vector<8x1xf32>
    %25 = vector.broadcast %24 : vector<8x1xf32> to vector<8x32xf32>
    %26 = arith.subf %18, %25 : vector<8x32xf32>
    %27 = arith.mulf %26, %26 : vector<8x32xf32>
    %cst_15 = arith.constant dense<0.000000e+00> : vector<8xf32>
    %28 = vector.multi_reduction <add>, %27, %cst_15 [1] : vector<8x32xf32> to vector<8xf32>
    %29 = vector.shape_cast %28 : vector<8xf32> to vector<8x1xf32>
    %cst_16 = arith.constant 3.125000e-02 : f32
    %30 = vector.broadcast %cst_16 : f32 to vector<8x1xf32>
    %31 = arith.mulf %29, %30 : vector<8x1xf32>
    %cst_17 = arith.constant 9.99999996E-13 : f32
    %32 = vector.broadcast %cst_17 : f32 to vector<8x1xf32>
    %33 = arith.addf %31, %32 : vector<8x1xf32>
    %34 = math.rsqrt %33 : vector<8x1xf32>
    %35 = vector.broadcast %34 : vector<8x1xf32> to vector<8x32xf32>
    %36 = vector.broadcast %19 : vector<1x32xf32> to vector<8x32xf32>
    %37 = arith.mulf %35, %36 : vector<8x32xf32>
    %38 = arith.mulf %18, %37 : vector<8x32xf32>
    %39 = vector.broadcast %24 : vector<8x1xf32> to vector<8x32xf32>
    %40 = arith.mulf %39, %37 : vector<8x32xf32>
    %41 = vector.broadcast %20 : vector<1x32xf32> to vector<8x32xf32>
    %42 = arith.subf %41, %40 : vector<8x32xf32>
    %43 = arith.addf %38, %42 : vector<8x32xf32>
    %c0_18 = arith.constant 0 : index
    %c0_19 = arith.constant 0 : index
    %44 = vector.load %arg6[%c0_18, %c0_19] : memref<8x32xf32, #tpu.memory_space<vmem>>, vector<8x32xf32>
    tpu.vector_store %arg6[%c0_18, %c0_19], %43 {strides = array<i32>} : memref<8x32xf32, #tpu.memory_space<vmem>>, vector<8x32xf32>,
    return
  }
  func.func @transform_0(%arg0: i32) -> (i32, i32) {
    %c0_i32 = arith.constant 0 : i32
    %c0_i32_0 = arith.constant 0 : i32
    return %arg0, %c0_i32 : i32, i32
  }
  func.func @transform_1(%arg0: i32) -> (i32, i32) {
    %c0_i32 = arith.constant 0 : i32
    %c0_i32_0 = arith.constant 0 : i32
    %c0_i32_1 = arith.constant 0 : i32
    return %c0_i32, %c0_i32_0 : i32, i32
  }
  func.func @transform_2(%arg0: i32) -> (i32, i32) {
    %c0_i32 = arith.constant 0 : i32
    %c0_i32_0 = arith.constant 0 : i32
    %c0_i32_1 = arith.constant 0 : i32
    return %c0_i32, %c0_i32_0 : i32, i32
  }
  func.func @transform_3(%arg0: i32) -> (i32, i32) {
    %c0_i32 = arith.constant 0 : i32
    %c0_i32_0 = arith.constant 0 : i32
    %c0_i32_1 = arith.constant 0 : i32
    return %c0_i32, %c0_i32_0 : i32, i32
  }
  func.func @transform_4(%arg0: i32) -> (i32, i32) {
    %c0_i32 = arith.constant 0 : i32
    %c0_i32_0 = arith.constant 0 : i32
    %c0_i32_1 = arith.constant 0 : i32
    return %c0_i32, %c0_i32_0 : i32, i32
  }
  func.func @transform_5(%arg0: i32) -> (i32, i32) {
    %c0_i32 = arith.constant 0 : i32
    %c0_i32_0 = arith.constant 0 : i32
    return %arg0, %c0_i32 : i32, i32
  }
}

module attributes {stable_mosaic.version = 11 : i64} {
  func.func @_fused_kernel(%arg0: i32, %arg1: memref<8x32xf32, #tpu.memory_space<vmem>>, %arg2: memref<32x32xf32, #tpu.memory_space<vmem>>, %arg3: memref<1x32xf32, #tpu.memory_space<vmem>>, %arg4: memref<1x32xf32, #tpu.memory_space<vmem>>, %arg5: memref<1x32xf32, #tpu.memory_space<vmem>>, %arg6: memref<8x32xf32, #tpu.memory_space<vmem>>) attributes {dimension_semantics = [#tpu.dimension_semantics<parallel>], iteration_bounds = array<i64: 2>, scalar_prefetch = 0 : i64, scratch_operands = 0 : i64, tpu.core_type = #tpu.core_type<tc>, window_params = [{transform_indices = @transform_0, window_bounds = array<i64: 8, 32>}, {pipeline_mode = #tpu.pipeline_mode<synchronous>, transform_indices = @transform_1, window_bounds = array<i64: 32, 32>}, {pipeline_mode = #tpu.pipeline_mode<synchronous>, transform_indices = @transform_2, window_bounds = array<i64: 1, 32>}, {pipeline_mode = #tpu.pipeline_mode<synchronous>, transform_indices = @transform_3, window_bounds = array<i64: 1, 32>}, {pipeline_mode = #tpu.pipeline_mode<synchronous>, transform_indices = @transform_4, window_bounds = array<i64: 1, 32>}, {transform_indices = @transform_5, window_bounds = array<i64: 8, 32>}]} {
    %c0 = arith.constant 0 : index
    %c0_0 = arith.constant 0 : index
    %0 = vector.load %arg1[%c0, %c0_0] : memref<8x32xf32, #tpu.memory_space<vmem>>, vector<8x32xf32>
    %c0_1 = arith.constant 0 : index
    %c0_2 = arith.constant 0 : index
    %1 = vector.load %arg2[%c0_1, %c0_2] : memref<32x32xf32, #tpu.memory_space<vmem>>, vector<32x32xf32>
    %cst = arith.constant dense<0.000000e+00> : vector<8x32xf32>
    %2 = tpu.matmul %0, %1, %cst {dimension_numbers = #tpu.dot_dimension_numbers<[1], [0], [0], [1], [0, 0, 1, 1], [], []>} : vector<8x32xf32>, vector<32x32xf32>, vector<8x32xf32> -> vector<8x32xf32>
    %c0_3 = arith.constant 0 : index
    %c0_4 = arith.constant 0 : index
    %3 = vector.load %arg3[%c0_3, %c0_4] : memref<1x32xf32, #tpu.memory_space<vmem>>, vector<1x32xf32>
    %4 = vector.broadcast %3 : vector<1x32xf32> to vector<8x32xf32>
    %5 = arith.addf %2, %4 : vector<8x32xf32>
    %cst_5 = arith.constant 5.000000e-01 : f32
    %6 = vector.broadcast %cst_5 : f32 to vector<8x32xf32>
    %7 = arith.mulf %6, %5 : vector<8x32xf32>
    %cst_6 = arith.constant 4.471500e-02 : f32
    %8 = vector.broadcast %cst_6 : f32 to vector<8x32xf32>
    %9 = arith.mulf %8, %5 : vector<8x32xf32>
    %10 = arith.mulf %9, %5 : vector<8x32xf32>
    %11 = arith.mulf %10, %5 : vector<8x32xf32>
    %12 = arith.addf %5, %11 : vector<8x32xf32>
    %cst_7 = arith.constant 0.797884583 : f32
    %13 = vector.broadcast %cst_7 : f32 to vector<8x32xf32>
    %14 = arith.mulf %13, %12 : vector<8x32xf32>
    %15 = math.tanh %14 : vector<8x32xf32>
    %cst_8 = arith.constant 1.000000e+00 : f32
    %16 = vector.broadcast %cst_8 : f32 to vector<8x32xf32>
    %17 = arith.addf %16, %15 : vector<8x32xf32>
    %18 = arith.mulf %7, %17 : vector<8x32xf32>
    %c0_9 = arith.constant 0 : index
    %c0_10 = arith.constant 0 : index
    %19 = vector.load %arg4[%c0_9, %c0_10] : memref<1x32xf32, #tpu.memory_space<vmem>>, vector<1x32xf32>
    %c0_11 = arith.constant 0 : index
    %c0_12 = arith.constant 0 : index
    %20 = vector.load %arg5[%c0_11, %c0_12] : memref<1x32xf32, #tpu.memory_space<vmem>>, vector<1x32xf32>
    %cst_13 = arith.constant dense<0.000000e+00> : vector<8xf32>
    %21 = vector.multi_reduction <add>, %18, %cst_13 [1] : vector<8x32xf32> to vector<8xf32>
    %22 = vector.shape_cast %21 : vector<8xf32> to vector<8x1xf32>
    %cst_14 = arith.constant 3.125000e-02 : f32
    %23 = vector.broadcast %cst_14 : f32 to vector<8x1xf32>
    %24 = arith.mulf %22, %23 : vector<8x1xf32>
    %25 = vector.broadcast %24 : vector<8x1xf32> to vector<8x32xf32>
    %26 = arith.subf %18, %25 : vector<8x32xf32>
    %27 = arith.mulf %26, %26 : vector<8x32xf32>
    %cst_15 = arith.constant dense<0.000000e+00> : vector<8xf32>
    %28 = vector.multi_reduction <add>, %27, %cst_15 [1] : vector<8x32xf32> to vector<8xf32>
    %29 = vector.shape_cast %28 : vector<8xf32> to vector<8x1xf32>
    %cst_16 = arith.constant 3.125000e-02 : f32
    %30 = vector.broadcast %cst_16 : f32 to vector<8x1xf32>
    %31 = arith.mulf %29, %30 : vector<8x1xf32>
    %cst_17 = arith.constant 9.99999996E-13 : f32
    %32 = vector.broadcast %cst_17 : f32 to vector<8x1xf32>
    %33 = arith.addf %31, %32 : vector<8x1xf32>
    %34 = math.rsqrt %33 : vector<8x1xf32>
    %35 = vector.broadcast %34 : vector<8x1xf32> to vector<8x32xf32>
    %36 = vector.broadcast %19 : vector<1x32xf32> to vector<8x32xf32>
    %37 = arith.mulf %35, %36 : vector<8x32xf32>
    %38 = arith.mulf %18, %37 : vector<8x32xf32>
    %39 = vector.broadcast %24 : vector<8x1xf32> to vector<8x32xf32>
    %40 = arith.mulf %39, %37 : vector<8x32xf32>
    %41 = vector.broadcast %20 : vector<1x32xf32> to vector<8x32xf32>
    %42 = arith.subf %41, %40 : vector<8x32xf32>
    %43 = arith.addf %38, %42 : vector<8x32xf32>
    %c0_18 = arith.constant 0 : index
    %c0_19 = arith.constant 0 : index
    %44 = vector.load %arg6[%c0_18, %c0_19] : memref<8x32xf32, #tpu.memory_space<vmem>>, vector<8x32xf32>
    tpu.vector_store %arg6[%c0_18, %c0_19], %43 {strides = array<i32>} : memref<8x32xf32, #tpu.memory_space<vmem>>, vector<8x32xf32>,
    return
  }
  func.func @transform_0(%arg0: i32) -> (i32, i32) {
    %c0_i32 = arith.constant 0 : i32
    %c0_i32_0 = arith.constant 0 : i32
    return %arg0, %c0_i32 : i32, i32
  }
  func.func @transform_1(%arg0: i32) -> (i32, i32) {
    %c0_i32 = arith.constant 0 : i32
    %c0_i32_0 = arith.constant 0 : i32
    %c0_i32_1 = arith.constant 0 : i32
    return %c0_i32, %c0_i32_0 : i32, i32
  }
  func.func @transform_2(%arg0: i32) -> (i32, i32) {
    %c0_i32 = arith.constant 0 : i32
    %c0_i32_0 = arith.constant 0 : i32
    %c0_i32_1 = arith.constant 0 : i32
    return %c0_i32, %c0_i32_0 : i32, i32
  }
  func.func @transform_3(%arg0: i32) -> (i32, i32) {
    %c0_i32 = arith.constant 0 : i32
    %c0_i32_0 = arith.constant 0 : i32
    %c0_i32_1 = arith.constant 0 : i32
    return %c0_i32, %c0_i32_0 : i32, i32
  }
  func.func @transform_4(%arg0: i32) -> (i32, i32) {
    %c0_i32 = arith.constant 0 : i32
    %c0_i32_0 = arith.constant 0 : i32
    %c0_i32_1 = arith.constant 0 : i32
    return %c0_i32, %c0_i32_0 : i32, i32
  }
  func.func @transform_5(%arg0: i32) -> (i32, i32) {
    %c0_i32 = arith.constant 0 : i32
    %c0_i32_0 = arith.constant 0 : i32
    return %arg0, %c0_i32 : i32, i32
  }
}

</mosaic_0001>

<llo_original>
// kernel: tpu_custom_call.1
$region0: #{tpu_custom_call.1}
  #allocation0 [shape = 'u32[]', space=smem, size = 0x4, offset = 0x4, fixed_abs, tag = 'smem constant byte address 0x4 - core index']
  #allocation1 [shape = 'u32[144,128]{1,0:T(1,128)}', space=vmem, size = 0x12000, scoped, tag = 'internal scratch']
  %s0 = inlined_call_operand.hbm [shape: f32[16,32], index: 0, kind: input, shape index: {}]
  %s1 = inlined_call_operand.hbm [shape: f32[32,32], index: 1, kind: input, shape index: {}]
  %s2 = inlined_call_operand.vmem [shape: f32[1,32], index: 2, kind: input, shape index: {}]
  %s3 = inlined_call_operand.vmem [shape: f32[1,32], index: 3, kind: input, shape index: {}]
  %s4 = inlined_call_operand.vmem [shape: f32[1,32], index: 4, kind: input, shape index: {}]
  %s5 = inlined_call_operand.hbm [shape: f32[16,32], index: 5, kind: output, shape index: {}]
  %s6 = sld [smem:[#allocation0]]
  $region61: #{tpu_custom_call.1} parent=0
    _
  %s8 = ssub.s32 1, %s6
  %s9 = scalar_select 0, %s8, %s6
  $region1: #{tpu_custom_call.1} parent=0
    #allocation2 [shape = 'u8[8192]{0}', space=vmem, size = 0x2000, scoped, tag = 'input window, operand 0']
    #allocation3 [shape = 's32[2]{0}', space=sflag, size = 0x8, scoped, tag = 'scoped memory for tpu_custom_call.1']
    #allocation4 [shape = 's32[2]{0}', space=sflag, size = 0x8, scoped, tag = 'scoped memory for tpu_custom_call.1']
    #allocation5 [shape = 'u8[16384]{0}', space=vmem, size = 0x4000, scoped, tag = 'input window, operand 1, single buffered']
    #allocation6 [shape = 's32[1]{0}', space=sflag, size = 0x4, scoped, tag = 'scoped memory for tpu_custom_call.1']
    #allocation7 [shape = 'u8[8192]{0}', space=vmem, size = 0x2000, scoped, tag = 'output window, operand 0']
    %10 = vsyncpa [#allocation3], 0
    %s11 = scalar_lea.sflag [#allocation3], 1
    %12 = vsyncpa %s11, 0
    %13 = vsyncpa [#allocation6], 0
    %14 = vsyncpa [#allocation4], 0
    %s15 = scalar_lea.sflag [#allocation4], 1
    %16 = vsyncpa %s15, 0
    loop: start=0, step=1, limit=4
    $region2: #{tpu_custom_call.1} parent=1 // loop_pre_header
      _
    $region3: #{tpu_custom_call.1} parent=1 // loop_header
      %s18 = sphi 0, %s22
      %p19 = scmp.ge.s32.totalorder %s18, 4
      %s28 = sphi 0, %s30
      %s31 = sphi 0, %s28
      %s32 = sphi 0, %s31
      %s48 = sphi 0, %s32
      %s52 = sphi 0, %s52
      %s54 = sphi 0, %s52
      %s55 = sphi 0, %s54
      %s69 = sphi 0, %s55
      %s73 = sphi 0, %s73
      %s75 = sphi 0, %s73
      %s76 = sphi 0, %s75
      %s90 = sphi 0, %s76
      %s94 = sphi 0, %s94
      %s96 = sphi 0, %s94
      %s97 = sphi 0, %s96
      %s111 = sphi 0, %s97
      %s115 = sphi 0, %s115
      %s117 = sphi 0, %s115
      %s118 = sphi 0, %s117
      %s132 = sphi 0, %s118
      %s138 = sphi 0, %s140
      %s141 = sphi 0, %s138
      %s142 = sphi 0, %s141
      %s158 = sphi 0, %s142
    $region4: #{tpu_custom_call.1} parent=1 // loop_header_branch
      %21 = sbr.rel (%p19) target = $region8
    $region5: #{tpu_custom_call.1} parent=1 // loop_body
      %s23 = ssub.s32 %s18, 1
      %s24 = ssub.s32 %s18, 2
      %s25 = sadd.s32 %s18, 1
      %s26 = ssub.s32 %s18, %s25
      %p27 = scmp.eq.s32.totalorder %s26, 0
      %s29 = sadd.s32 %s28, 1
      %s30 = scalar_select %p27, %s28, %s29
      %p33 = pneg %p27
      %p34 = scmp.eq.s32.totalorder %s18, 1
      %p35 = por %p33, %p34
      %p36 = scmp.ne.s32.totalorder %s28, %s31
      %p37 = scmp.eq.s32.totalorder %s18, 0
      %p38 = por %p36, %p37
      %p39 = scmp.ne.s32.totalorder %s28, %s31
      %p40 = scmp.eq.s32.totalorder %s23, 1
      %p41 = por %p39, %p40
      %p42 = scmp.ne.s32.totalorder %s31, %s32
      %p43 = scmp.eq.s32.totalorder %s23, 0
      %p44 = por %p42, %p43
      %p45 = scmp.ne.s32.totalorder %s31, %s32
      %p46 = scmp.eq.s32.totalorder %s24, 1
      %p47 = por %p45, %p46
      %p49 = scmp.ne.s32.totalorder %s32, %s48
      %p50 = scmp.eq.s32.totalorder %s24, 0
      %p51 = por %p49, %p50
      %s53 = sadd.s32 %s52, 1
      %p56 = scmp.eq.s32.totalorder %s18, 1
      %p57 = scmp.ne.s32.totalorder %s52, %s54
      %p58 = scmp.eq.s32.totalorder %s18, 0
      %p59 = por %p57, %p58
      %p60 = scmp.ne.s32.totalorder %s52, %s54
      %p61 = scmp.eq.s32.totalorder %s23, 1
      %p62 = por %p60, %p61
      %p63 = scmp.ne.s32.totalorder %s54, %s55
      %p64 = scmp.eq.s32.totalorder %s23, 0
      %p65 = por %p63, %p64
      %p66 = scmp.ne.s32.totalorder %s54, %s55
      %p67 = scmp.eq.s32.totalorder %s24, 1
      %p68 = por %p66, %p67
      %p70 = scmp.ne.s32.totalorder %s55, %s69
      %p71 = scmp.eq.s32.totalorder %s24, 0
      %p72 = por %p70, %p71
      %s74 = sadd.s32 %s73, 1
      %p77 = scmp.eq.s32.totalorder %s18, 1
      %p78 = scmp.ne.s32.totalorder %s73, %s75
      %p79 = scmp.eq.s32.totalorder %s18, 0
      %p80 = por %p78, %p79
      %p81 = scmp.ne.s32.totalorder %s73, %s75
      %p82 = scmp.eq.s32.totalorder %s23, 1
      %p83 = por %p81, %p82
      %p84 = scmp.ne.s32.totalorder %s75, %s76
      %p85 = scmp.eq.s32.totalorder %s23, 0
      %p86 = por %p84, %p85
      %p87 = scmp.ne.s32.totalorder %s75, %s76
      %p88 = scmp.eq.s32.totalorder %s24, 1
      %p89 = por %p87, %p88
      %p91 = scmp.ne.s32.totalorder %s76, %s90
      %p92 = scmp.eq.s32.totalorder %s24, 0
      %p93 = por %p91, %p92
      %s95 = sadd.s32 %s94, 1
      %p98 = scmp.eq.s32.totalorder %s18, 1
      %p99 = scmp.ne.s32.totalorder %s94, %s96
      %p100 = scmp.eq.s32.totalorder %s18, 0
      %p101 = por %p99, %p100
      %p102 = scmp.ne.s32.totalorder %s94, %s96
      %p103 = scmp.eq.s32.totalorder %s23, 1
      %p104 = por %p102, %p103
      %p105 = scmp.ne.s32.totalorder %s96, %s97
      %p106 = scmp.eq.s32.totalorder %s23, 0
      %p107 = por %p105, %p106
      %p108 = scmp.ne.s32.totalorder %s96, %s97
      %p109 = scmp.eq.s32.totalorder %s24, 1
      %p110 = por %p108, %p109
      %p112 = scmp.ne.s32.totalorder %s97, %s111
      %p113 = scmp.eq.s32.totalorder %s24, 0
      %p114 = por %p112, %p113
      %s116 = sadd.s32 %s115, 1
      %p119 = scmp.eq.s32.totalorder %s18, 1
      %p120 = scmp.ne.s32.totalorder %s115, %s117
      %p121 = scmp.eq.s32.totalorder %s18, 0
      %p122 = por %p120, %p121
      %p123 = scmp.ne.s32.totalorder %s115, %s117
      %p124 = scmp.eq.s32.totalorder %s23, 1
      %p125 = por %p123, %p124
      %p126 = scmp.ne.s32.totalorder %s117, %s118
      %p127 = scmp.eq.s32.totalorder %s23, 0
      %p128 = por %p126, %p127
      %p129 = scmp.ne.s32.totalorder %s117, %s118
      %p130 = scmp.eq.s32.totalorder %s24, 1
      %p131 = por %p129, %p130
      %p133 = scmp.ne.s32.totalorder %s118, %s132
      %p134 = scmp.eq.s32.totalorder %s24, 0
      %p135 = por %p133, %p134
      %s136 = ssub.s32 %s18, %s25
      %p137 = scmp.eq.s32.totalorder %s136, 0
      %s139 = sadd.s32 %s138, 1
      %s140 = scalar_select %p137, %s138, %s139
      %p143 = pneg %p137
      %p144 = scmp.eq.s32.totalorder %s18, 1
      %p145 = por %p143, %p144
      %p146 = scmp.ne.s32.totalorder %s138, %s141
      %p147 = scmp.eq.s32.totalorder %s18, 0
      %p148 = por %p146, %p147
      %p149 = scmp.ne.s32.totalorder %s138, %s141
      %p150 = scmp.eq.s32.totalorder %s23, 1
      %p151 = por %p149, %p150
      %p152 = scmp.ne.s32.totalorder %s141, %s142
      %p153 = scmp.eq.s32.totalorder %s23, 0
      %p154 = por %p152, %p153
      %p155 = scmp.ne.s32.totalorder %s141, %s142
      %p156 = scmp.eq.s32.totalorder %s24, 1
      %p157 = por %p155, %p156
      %p159 = scmp.ne.s32.totalorder %s142, %s158
      %p160 = scmp.eq.s32.totalorder %s24, 0
      %p161 = por %p159, %p160
      %p162 = scmp.le.s32.totalorder 1, %s18
      %p163 = scmp.lt.s32.totalorder %s18, 3
      %p164 = pnand %p162, %p163
      %p165 = pneg %p164
      // Predicated region
      $region9: #{tpu_custom_call.1} parent=5 // pred_check
        _
      $region10: #{tpu_custom_call.1} parent=5 // pred_check_branch
        %167 = sbr.rel (%p164) target = $region12
      $region11: #{tpu_custom_call.1} parent=5 // pred_region
        %s168 = ssub.s32 %s18, 1
        // Predicated region
        $region13: #{tpu_custom_call.1} parent=11 // pred_check
          %p169 = pneg %p65
        $region14: #{tpu_custom_call.1} parent=11 // pred_check_branch
          %171 = sbr.rel (%p169) target = $region16
        $region15: #{tpu_custom_call.1} parent=11 // pred_region
          %s173 = ssub.s32 512, 512
          %174 = vsyncadd [#allocation6], %s173
          %s175 = sshll.u32 [#allocation5], 4
          %s176 = int_to_ptr.vmem [resolvable:$true] %s175
          %181 = dma.hbm_to_vmem [thread:$0]  %s1, 512, %s176, [#allocation6], 128, 128, 8
        $region16: #{tpu_custom_call.1} parent=11 // pred_fallthru
          _
        // Predicated region
        $region17: #{tpu_custom_call.1} parent=11 // pred_check
          %p182 = pneg %p86
        $region18: #{tpu_custom_call.1} parent=11 // pred_check_branch
          %184 = sbr.rel (%p182) target = $region20
        $region19: #{tpu_custom_call.1} parent=11 // pred_region
          _
        $region20: #{tpu_custom_call.1} parent=11 // pred_fallthru
          _
        // Predicated region
        $region21: #{tpu_custom_call.1} parent=11 // pred_check
          %p185 = pneg %p107
        $region22: #{tpu_custom_call.1} parent=11 // pred_check_branch
          %187 = sbr.rel (%p185) target = $region24
        $region23: #{tpu_custom_call.1} parent=11 // pred_region
          _
        $region24: #{tpu_custom_call.1} parent=11 // pred_fallthru
          _
        // Predicated region
        $region25: #{tpu_custom_call.1} parent=11 // pred_check
          %p188 = pneg %p128
        $region26: #{tpu_custom_call.1} parent=11 // pred_check_branch
          %190 = sbr.rel (%p188) target = $region28
        $region27: #{tpu_custom_call.1} parent=11 // pred_region
          _
        $region28: #{tpu_custom_call.1} parent=11 // pred_fallthru
          _
      $region12: #{tpu_custom_call.1} parent=5 // pred_fallthru
        _
      %p191 = scmp.lt.s32.totalorder %s18, 2
      // Predicated region
      $region29: #{tpu_custom_call.1} parent=5 // pred_check
        %p192 = pneg %p191
      $region30: #{tpu_custom_call.1} parent=5 // pred_check_branch
        %194 = sbr.rel (%p192) target = $region32
      $region31: #{tpu_custom_call.1} parent=5 // pred_region
        // Predicated region
        $region33: #{tpu_custom_call.1} parent=31 // pred_check
          %p195 = pneg %p38
        $region34: #{tpu_custom_call.1} parent=31 // pred_check_branch
          %197 = sbr.rel (%p195) target = $region36
        $region35: #{tpu_custom_call.1} parent=31 // pred_region
          %s198 = sand.u32 %s28, 1
          %s199 = scalar_lea.sflag [#allocation3], %s198
          %s200 = sand.u32 %s28, 1
          %s201 = smul.addr %s200, 8
          %s202 = scalar_lea.vmem [#allocation2], %s201
          %s204 = ssub.s32 128, 128
          %205 = vsyncadd %s199, %s204
          %s206 = smul.addr %s18, 128
          %s207 = scalar_lea.hbm %s0, %s206
          %s209 = sshll.u32 %s202, 4
          %s210 = int_to_ptr.vmem [resolvable:$true] %s209
          %212 = dma.hbm_to_vmem [thread:$0]  %s207, 128, %s210, %s199
        $region36: #{tpu_custom_call.1} parent=31 // pred_fallthru
          _
      $region32: #{tpu_custom_call.1} parent=5 // pred_fallthru
        _
      %p213 = scmp.le.s32.totalorder 1, %s18
      %p214 = scmp.lt.s32.totalorder %s18, 3
      %p215 = pnand %p213, %p214
      %p216 = pneg %p215
      // Predicated region
      $region37: #{tpu_custom_call.1} parent=5 // pred_check
        _
      $region38: #{tpu_custom_call.1} parent=5 // pred_check_branch
        %218 = sbr.rel (%p215) target = $region40
      $region39: #{tpu_custom_call.1} parent=5 // pred_region
        %s219 = ssub.s32 %s18, 1
        %s220 = sand.u32 %s31, 1
        %s221 = scalar_lea.sflag [#allocation3], %s220
        %s222 = sand.u32 %s31, 1
        %s223 = smul.addr %s222, 8
        %s224 = scalar_lea.vmem [#allocation2], %s223
        // Predicated region
        $region41: #{tpu_custom_call.1} parent=39 // pred_check
          %p225 = pneg %p44
        $region42: #{tpu_custom_call.1} parent=39 // pred_check_branch
          %227 = sbr.rel (%p225) target = $region44
        $region43: #{tpu_custom_call.1} parent=39 // pred_region
          %228 = dma.done %s221, 128
        $region44: #{tpu_custom_call.1} parent=39 // pred_fallthru
          _
        // Predicated region
        $region45: #{tpu_custom_call.1} parent=39 // pred_check
          %p229 = pneg %p65
        $region46: #{tpu_custom_call.1} parent=39 // pred_check_branch
          %231 = sbr.rel (%p229) target = $region48
        $region47: #{tpu_custom_call.1} parent=39 // pred_region
          %232 = dma.done [#allocation6], 512
        $region48: #{tpu_custom_call.1} parent=39 // pred_fallthru
          _
        %s233 = sand.u32 %s31, 1
        %s234 = scalar_lea.sflag [#allocation3], %s233
        %s235 = sand.u32 %s31, 1
        %s236 = smul.addr %s235, 8
        %s237 = scalar_lea.vmem [#allocation2], %s236
        %p238 = pneg %p44
        %p239 = pneg %p41
        %p240 = pneg %p65
        %p241 = pneg %p62
        %p242 = pneg %p86
        %p243 = pneg %p83
        %p244 = pneg %p107
        %p245 = pneg %p104
        %p246 = pneg %p128
        %p247 = pneg %p125
        %p248 = pneg %p154
        %p249 = pneg %p151
        %s250 = sand.u32 %s141, 1
        %s251 = scalar_lea.sflag [#allocation4], %s250
        %s252 = sand.u32 %s141, 1
        %s253 = smul.addr %s252, 8
        %s254 = scalar_lea.vmem [#allocation7], %s253
        %v255 = vld [vmem:[%s224] sm:$0xff]
        %v256 = vld [vmem:[#allocation5] sm:$0xff]
        %v257 = vld [vmem:[#allocation5 + $0x8] sm:$0xff]
        %v258 = vld [vmem:[#allocation5 + $0x10] sm:$0xff]
        %v259 = vld [vmem:[#allocation5 + $0x18] sm:$0xff]
        %v260 = vld [vmem:[%s2] sm:$0x1]
        %v262 = vlaneseq
        %v263 = vshrl.u32 %v262, 7
        %v264 = vsub.s32 0, %v263
        %v265 = vrot.slane %v260, %v264
        %vm267 = vcmask 261120
        %v269 = vsel %vm267, %v255, 0
        %271 = vmatprep.subr.mxu0 0.0
        %272 = vmatpush1.msra.mxu0 %v256
        %273 = vmatprep.subr.mxu0 0.0
        %274 = vmatpush1.msra.mxu0 %v257
        %275 = vmatprep.subr.mxu0 0.0
        %276 = vmatpush1.msra.mxu0 %v258
        %277 = vmatprep.subr.mxu0 0.0
        %278 = vmatpush1.msra.mxu0 %v259
        %279 = vmatprep.subr.mxu0 0.0
        %280 = vmatpush1.msra.mxu0 0.0
        %281 = vmatprep.subr.mxu0 0.0
        %282 = vmatpush1.msra.mxu0 0.0
        %283 = vmatprep.subr.mxu0 0.0
        %284 = vmatpush1.msra.mxu0 0.0
        %285 = vmatprep.subr.mxu0 0.0
        %286 = vmatpush1.msra.mxu0 0.0
        %287 = vmatprep.subr.mxu0 0.0
        %288 = vmatpush1.msra.mxu0 0.0
        %289 = vmatprep.subr.mxu0 0.0
        %290 = vmatpush1.msra.mxu0 0.0
        %291 = vmatprep.subr.mxu0 0.0
        %292 = vmatpush1.msra.mxu0 0.0
        %293 = vmatprep.subr.mxu0 0.0
        %294 = vmatpush1.msra.mxu0 0.0
        %295 = vmatprep.subr.mxu0 0.0
        %296 = vmatpush1.msra.mxu0 0.0
        %297 = vmatprep.subr.mxu0 0.0
        %298 = vmatpush1.msra.mxu0 0.0
        %299 = vmatprep.subr.mxu0 0.0
        %300 = vmatpush1.msra.mxu0 0.0
        %301 = vmatprep.subr.mxu0 0.0
        %302 = vmatpush1.msra.mxu0 0.0
        %303 = vmatprep.subr.mxu0 0.0
        %304 = vmatpush1.msra.mxu0 0.0
        %305 = vmatprep.subr.mxu0 0.0
        %306 = vmatpush1.msra.mxu0 0.0
        %307 = vmatprep.subr.mxu0 0.0
        %308 = vmatpush1.msra.mxu0 0.0
        %309 = vmatprep.subr.mxu0 0.0
        %310 = vmatpush1.msra.mxu0 0.0
        %311 = vmatprep.subr.mxu0 0.0
        %312 = vmatpush1.msra.mxu0 0.0
        %313 = vmatprep.subr.mxu0 0.0
        %314 = vmatpush1.msra.mxu0 0.0
        %315 = vmatprep.subr.mxu0 0.0
        %316 = vmatpush1.msra.mxu0 0.0
        %317 = vmatprep.subr.mxu0 0.0
        %318 = vmatpush1.msra.mxu0 0.0
        %319 = vmatprep.subr.mxu0 0.0
        %320 = vmatpush1.msra.mxu0 0.0
        %321 = vmatprep.subr.mxu0 0.0
        %322 = vmatpush1.msra.mxu0 0.0
        %323 = vmatprep.subr.mxu0 0.0
        %324 = vmatpush1.msra.mxu0 0.0
        %325 = vmatprep.subr.mxu0 0.0
        %326 = vmatpush1.msra.mxu0 0.0
        %327 = vmatprep.subr.mxu0 0.0
        %328 = vmatpush1.msra.mxu0 0.0
        %329 = vmatprep.subr.mxu0 0.0
        %330 = vmatpush1.msra.mxu0 0.0
        %331 = vmatprep.subr.mxu0 0.0
        %332 = vmatpush1.msra.mxu0 0.0
        %333 = vmatprep.subr.mxu0 0.0
        %334 = vmatpush1.msra.mxu0 0.0
        %335 = vmatprep.mubr.f32.mxu0 0.0
        %336 = vmatmul.mubr.f32.gmra.mrb[0].mxu0 %v269
        %v337 = vpop.f32.mrb[0].mxu0
        %v338 = vadd.f32 %v265, %v337
        %v339 = vpop.f32.mrb[0].mxu0
        %340 = vdwg.mxu0
        %v341 = vmul.f32 %v338, 0.5
        %v342 = vmul.f32 %v338, 0.044715
        %v343 = vmul.f32 %v342, %v338
        %v344 = vmul.f32 %v343, %v338
        %v345 = vadd.f32 %v338, %v344
        %v346 = vmul.f32 %v345, 0.7978846
        %v347 = vtanh.pop %v346
        %v348 = vadd.f32 %v347, 1.0
        %v349 = vmul.f32 %v341, %v348
        %v350 = vld [vmem:[%s3] sm:$0x1]
        %v351 = vld [vmem:[%s4] sm:$0x1]
        %v352 = vsel %vm267, %v349, 0.0
        %353 = vadd.xlane.f32.xlu0 %v352
        %v354 = vpop.xlane.xlu0 %353
        %v355 = vmul.f32 %v354, 0.03125
        %v356 = vsub.f32 %v349, %v355
        %v357 = vmul.f32 %v356, %v356
        %v358 = vsel %vm267, %v357, 0.0
        %359 = vadd.xlane.f32.xlu0 %v358
        %v360 = vpop.xlane.xlu0 %359
        %v361 = vmul.f32 %v360, 0.03125
        %v362 = vadd.f32 %v361, 1e-12
        %v363 = vrsqrt.pop %v362
        %v365 = vlaneseq
        %v366 = vshrl.u32 %v365, 7
        %v367 = vsub.s32 0, %v366
        %v368 = vrot.slane %v350, %v367
        %v370 = vmul.f32 %v363, %v368
        %v371 = vmul.f32 %v349, %v370
        %v372 = vmul.f32 %v355, %v370
        %v374 = vlaneseq
        %v375 = vshrl.u32 %v374, 7
        %v376 = vsub.s32 0, %v375
        %v377 = vrot.slane %v351, %v376
        %v379 = vsub.f32 %v377, %v372
        %v380 = vadd.f32 %v371, %v379
        %381 = vst.msk [vmem:[%s254] sm:$0xff] %vm267, %v380
        %s382 = sand.u32 %s141, 1
        %s383 = scalar_lea.sflag [#allocation4], %s382
        %s384 = sand.u32 %s141, 1
        %s385 = smul.addr %s384, 8
        %s386 = scalar_lea.vmem [#allocation7], %s385
        // Predicated region
        $region49: #{tpu_custom_call.1} parent=39 // pred_check
          %p387 = pneg %p151
        $region50: #{tpu_custom_call.1} parent=39 // pred_check_branch
          %389 = sbr.rel (%p387) target = $region52
        $region51: #{tpu_custom_call.1} parent=39 // pred_region
          %s391 = ssub.s32 128, 128
          %392 = vsyncadd %s383, %s391
          %s393 = smul.addr %s23, 128
          %s394 = scalar_lea.hbm %s5, %s393
          %s396 = sshll.u32 %s386, 4
          %s397 = int_to_ptr.vmem [resolvable:$true] %s396
          %399 = dma.vmem_to_hbm [thread:$0]  %s397, 128, %s394, %s383
        $region52: #{tpu_custom_call.1} parent=39 // pred_fallthru
          _
      $region40: #{tpu_custom_call.1} parent=5 // pred_fallthru
        _
      %p400 = scmp.le.s32.totalorder 2, %s18
      // Predicated region
      $region53: #{tpu_custom_call.1} parent=5 // pred_check
        %p401 = pneg %p400
      $region54: #{tpu_custom_call.1} parent=5 // pred_check_branch
        %403 = sbr.rel (%p401) target = $region56
      $region55: #{tpu_custom_call.1} parent=5 // pred_region
        %s404 = ssub.s32 %s18, 2
        // Predicated region
        $region57: #{tpu_custom_call.1} parent=55 // pred_check
          %p405 = pneg %p157
        $region58: #{tpu_custom_call.1} parent=55 // pred_check_branch
          %407 = sbr.rel (%p405) target = $region60
        $region59: #{tpu_custom_call.1} parent=55 // pred_region
          %s408 = sand.u32 %s142, 1
          %s409 = scalar_lea.sflag [#allocation4], %s408
          %s410 = sand.u32 %s142, 1
          %s411 = smul.addr %s410, 8
          %s412 = scalar_lea.vmem [#allocation7], %s411
          %413 = dma.done %s409, 128
        $region60: #{tpu_custom_call.1} parent=55 // pred_fallthru
          _
      $region56: #{tpu_custom_call.1} parent=5 // pred_fallthru
        _
    $region6: #{tpu_custom_call.1} parent=1 // loop_footer
      %s22 = sadd.s32 1, %s18
    $region7: #{tpu_custom_call.1} parent=1 // loop_footer_branch
      %17 = sbr.rel target = $region3
    $region8: #{tpu_custom_call.1} parent=1 // loop_exit
      _
    %414 = vsyncpa [#allocation3], 1
    %s415 = scalar_lea.sflag [#allocation3], 1
    %416 = vsyncpa %s415, 1
    %417 = vsyncpa [#allocation6], 1
    %418 = vsyncpa [#allocation4], 1
    %s419 = scalar_lea.sflag [#allocation4], 1
    %420 = vsyncpa %s419, 1

// kernel: tpu_custom_call.1
$region0: #{tpu_custom_call.1}
  #allocation0 [shape = 'u32[]', space=smem, size = 0x4, offset = 0x4, fixed_abs, tag = 'smem constant byte address 0x4 - core index']
  #allocation1 [shape = 'u32[144,128]{1,0:T(1,128)}', space=vmem, size = 0x12000, scoped, tag = 'internal scratch']
  %s0 = inlined_call_operand.hbm [shape: f32[16,32], index: 0, kind: input, shape index: {}]
  %s1 = inlined_call_operand.hbm [shape: f32[32,32], index: 1, kind: input, shape index: {}]
  %s2 = inlined_call_operand.vmem [shape: f32[1,32], index: 2, kind: input, shape index: {}]
  %s3 = inlined_call_operand.vmem [shape: f32[1,32], index: 3, kind: input, shape index: {}]
  %s4 = inlined_call_operand.vmem [shape: f32[1,32], index: 4, kind: input, shape index: {}]
  %s5 = inlined_call_operand.hbm [shape: f32[16,32], index: 5, kind: output, shape index: {}]
  %s6 = sld [smem:[#allocation0]]
  $region61: #{tpu_custom_call.1} parent=0
    _
  %s8 = ssub.s32 1, %s6
  %s9 = scalar_select 0, %s8, %s6
  $region1: #{tpu_custom_call.1} parent=0
    #allocation2 [shape = 'u8[8192]{0}', space=vmem, size = 0x2000, scoped, tag = 'input window, operand 0']
    #allocation3 [shape = 's32[2]{0}', space=sflag, size = 0x8, scoped, tag = 'scoped memory for tpu_custom_call.1']
    #allocation4 [shape = 's32[2]{0}', space=sflag, size = 0x8, scoped, tag = 'scoped memory for tpu_custom_call.1']
    #allocation5 [shape = 'u8[16384]{0}', space=vmem, size = 0x4000, scoped, tag = 'input window, operand 1, single buffered']
    #allocation6 [shape = 's32[1]{0}', space=sflag, size = 0x4, scoped, tag = 'scoped memory for tpu_custom_call.1']
    #allocation7 [shape = 'u8[8192]{0}', space=vmem, size = 0x2000, scoped, tag = 'output window, operand 0']
    %10 = vsyncpa [#allocation3], 0
    %s11 = scalar_lea.sflag [#allocation3], 1
    %12 = vsyncpa %s11, 0
    %13 = vsyncpa [#allocation6], 0
    %14 = vsyncpa [#allocation4], 0
    %s15 = scalar_lea.sflag [#allocation4], 1
    %16 = vsyncpa %s15, 0
    loop: start=0, step=1, limit=4
    $region2: #{tpu_custom_call.1} parent=1 // loop_pre_header
      _
    $region3: #{tpu_custom_call.1} parent=1 // loop_header
      %s18 = sphi 0, %s22
      %p19 = scmp.ge.s32.totalorder %s18, 4
      %s28 = sphi 0, %s30
      %s31 = sphi 0, %s28
      %s32 = sphi 0, %s31
      %s48 = sphi 0, %s32
      %s52 = sphi 0, %s52
      %s54 = sphi 0, %s52
      %s55 = sphi 0, %s54
      %s69 = sphi 0, %s55
      %s73 = sphi 0, %s73
      %s75 = sphi 0, %s73
      %s76 = sphi 0, %s75
      %s90 = sphi 0, %s76
      %s94 = sphi 0, %s94
      %s96 = sphi 0, %s94
      %s97 = sphi 0, %s96
      %s111 = sphi 0, %s97
      %s115 = sphi 0, %s115
      %s117 = sphi 0, %s115
      %s118 = sphi 0, %s117
      %s132 = sphi 0, %s118
      %s138 = sphi 0, %s140
      %s141 = sphi 0, %s138
      %s142 = sphi 0, %s141
      %s158 = sphi 0, %s142
    $region4: #{tpu_custom_call.1} parent=1 // loop_header_branch
      %21 = sbr.rel (%p19) target = $region8
    $region5: #{tpu_custom_call.1} parent=1 // loop_body
      %s23 = ssub.s32 %s18, 1
      %s24 = ssub.s32 %s18, 2
      %s25 = sadd.s32 %s18, 1
      %s26 = ssub.s32 %s18, %s25
      %p27 = scmp.eq.s32.totalorder %s26, 0
      %s29 = sadd.s32 %s28, 1
      %s30 = scalar_select %p27, %s28, %s29
      %p33 = pneg %p27
      %p34 = scmp.eq.s32.totalorder %s18, 1
      %p35 = por %p33, %p34
      %p36 = scmp.ne.s32.totalorder %s28, %s31
      %p37 = scmp.eq.s32.totalorder %s18, 0
      %p38 = por %p36, %p37
      %p39 = scmp.ne.s32.totalorder %s28, %s31
      %p40 = scmp.eq.s32.totalorder %s23, 1
      %p41 = por %p39, %p40
      %p42 = scmp.ne.s32.totalorder %s31, %s32
      %p43 = scmp.eq.s32.totalorder %s23, 0
      %p44 = por %p42, %p43
      %p45 = scmp.ne.s32.totalorder %s31, %s32
      %p46 = scmp.eq.s32.totalorder %s24, 1
      %p47 = por %p45, %p46
      %p49 = scmp.ne.s32.totalorder %s32, %s48
      %p50 = scmp.eq.s32.totalorder %s24, 0
      %p51 = por %p49, %p50
      %s53 = sadd.s32 %s52, 1
      %p56 = scmp.eq.s32.totalorder %s18, 1
      %p57 = scmp.ne.s32.totalorder %s52, %s54
      %p58 = scmp.eq.s32.totalorder %s18, 0
      %p59 = por %p57, %p58
      %p60 = scmp.ne.s32.totalorder %s52, %s54
      %p61 = scmp.eq.s32.totalorder %s23, 1
      %p62 = por %p60, %p61
      %p63 = scmp.ne.s32.totalorder %s54, %s55
      %p64 = scmp.eq.s32.totalorder %s23, 0
      %p65 = por %p63, %p64
      %p66 = scmp.ne.s32.totalorder %s54, %s55
      %p67 = scmp.eq.s32.totalorder %s24, 1
      %p68 = por %p66, %p67
      %p70 = scmp.ne.s32.totalorder %s55, %s69
      %p71 = scmp.eq.s32.totalorder %s24, 0
      %p72 = por %p70, %p71
      %s74 = sadd.s32 %s73, 1
      %p77 = scmp.eq.s32.totalorder %s18, 1
      %p78 = scmp.ne.s32.totalorder %s73, %s75
      %p79 = scmp.eq.s32.totalorder %s18, 0
      %p80 = por %p78, %p79
      %p81 = scmp.ne.s32.totalorder %s73, %s75
      %p82 = scmp.eq.s32.totalorder %s23, 1
      %p83 = por %p81, %p82
      %p84 = scmp.ne.s32.totalorder %s75, %s76
      %p85 = scmp.eq.s32.totalorder %s23, 0
      %p86 = por %p84, %p85
      %p87 = scmp.ne.s32.totalorder %s75, %s76
      %p88 = scmp.eq.s32.totalorder %s24, 1
      %p89 = por %p87, %p88
      %p91 = scmp.ne.s32.totalorder %s76, %s90
      %p92 = scmp.eq.s32.totalorder %s24, 0
      %p93 = por %p91, %p92
      %s95 = sadd.s32 %s94, 1
      %p98 = scmp.eq.s32.totalorder %s18, 1
      %p99 = scmp.ne.s32.totalorder %s94, %s96
      %p100 = scmp.eq.s32.totalorder %s18, 0
      %p101 = por %p99, %p100
      %p102 = scmp.ne.s32.totalorder %s94, %s96
      %p103 = scmp.eq.s32.totalorder %s23, 1
      %p104 = por %p102, %p103
      %p105 = scmp.ne.s32.totalorder %s96, %s97
      %p106 = scmp.eq.s32.totalorder %s23, 0
      %p107 = por %p105, %p106
      %p108 = scmp.ne.s32.totalorder %s96, %s97
      %p109 = scmp.eq.s32.totalorder %s24, 1
      %p110 = por %p108, %p109
      %p112 = scmp.ne.s32.totalorder %s97, %s111
      %p113 = scmp.eq.s32.totalorder %s24, 0
      %p114 = por %p112, %p113
      %s116 = sadd.s32 %s115, 1
      %p119 = scmp.eq.s32.totalorder %s18, 1
      %p120 = scmp.ne.s32.totalorder %s115, %s117
      %p121 = scmp.eq.s32.totalorder %s18, 0
      %p122 = por %p120, %p121
      %p123 = scmp.ne.s32.totalorder %s115, %s117
      %p124 = scmp.eq.s32.totalorder %s23, 1
      %p125 = por %p123, %p124
      %p126 = scmp.ne.s32.totalorder %s117, %s118
      %p127 = scmp.eq.s32.totalorder %s23, 0
      %p128 = por %p126, %p127
      %p129 = scmp.ne.s32.totalorder %s117, %s118
      %p130 = scmp.eq.s32.totalorder %s24, 1
      %p131 = por %p129, %p130
      %p133 = scmp.ne.s32.totalorder %s118, %s132
      %p134 = scmp.eq.s32.totalorder %s24, 0
      %p135 = por %p133, %p134
      %s136 = ssub.s32 %s18, %s25
      %p137 = scmp.eq.s32.totalorder %s136, 0
      %s139 = sadd.s32 %s138, 1
      %s140 = scalar_select %p137, %s138, %s139
      %p143 = pneg %p137
      %p144 = scmp.eq.s32.totalorder %s18, 1
      %p145 = por %p143, %p144
      %p146 = scmp.ne.s32.totalorder %s138, %s141
      %p147 = scmp.eq.s32.totalorder %s18, 0
      %p148 = por %p146, %p147
      %p149 = scmp.ne.s32.totalorder %s138, %s141
      %p150 = scmp.eq.s32.totalorder %s23, 1
      %p151 = por %p149, %p150
      %p152 = scmp.ne.s32.totalorder %s141, %s142
      %p153 = scmp.eq.s32.totalorder %s23, 0
      %p154 = por %p152, %p153
      %p155 = scmp.ne.s32.totalorder %s141, %s142
      %p156 = scmp.eq.s32.totalorder %s24, 1
      %p157 = por %p155, %p156
      %p159 = scmp.ne.s32.totalorder %s142, %s158
      %p160 = scmp.eq.s32.totalorder %s24, 0
      %p161 = por %p159, %p160
      %p162 = scmp.le.s32.totalorder 1, %s18
      %p163 = scmp.lt.s32.totalorder %s18, 3
      %p164 = pnand %p162, %p163
      %p165 = pneg %p164
      // Predicated region
      $region9: #{tpu_custom_call.1} parent=5 // pred_check
        _
      $region10: #{tpu_custom_call.1} parent=5 // pred_check_branch
        %167 = sbr.rel (%p164) target = $region12
      $region11: #{tpu_custom_call.1} parent=5 // pred_region
        %s168 = ssub.s32 %s18, 1
        // Predicated region
        $region13: #{tpu_custom_call.1} parent=11 // pred_check
          %p169 = pneg %p65
        $region14: #{tpu_custom_call.1} parent=11 // pred_check_branch
          %171 = sbr.rel (%p169) target = $region16
        $region15: #{tpu_custom_call.1} parent=11 // pred_region
          %s173 = ssub.s32 512, 512
          %174 = vsyncadd [#allocation6], %s173
          %s175 = sshll.u32 [#allocation5], 4
          %s176 = int_to_ptr.vmem [resolvable:$true] %s175
          %181 = dma.hbm_to_vmem [thread:$0]  %s1, 512, %s176, [#allocation6], 128, 128, 8
        $region16: #{tpu_custom_call.1} parent=11 // pred_fallthru
          _
        // Predicated region
        $region17: #{tpu_custom_call.1} parent=11 // pred_check
          %p182 = pneg %p86
        $region18: #{tpu_custom_call.1} parent=11 // pred_check_branch
          %184 = sbr.rel (%p182) target = $region20
        $region19: #{tpu_custom_call.1} parent=11 // pred_region
          _
        $region20: #{tpu_custom_call.1} parent=11 // pred_fallthru
          _
        // Predicated region
        $region21: #{tpu_custom_call.1} parent=11 // pred_check
          %p185 = pneg %p107
        $region22: #{tpu_custom_call.1} parent=11 // pred_check_branch
          %187 = sbr.rel (%p185) target = $region24
        $region23: #{tpu_custom_call.1} parent=11 // pred_region
          _
        $region24: #{tpu_custom_call.1} parent=11 // pred_fallthru
          _
        // Predicated region
        $region25: #{tpu_custom_call.1} parent=11 // pred_check
          %p188 = pneg %p128
        $region26: #{tpu_custom_call.1} parent=11 // pred_check_branch
          %190 = sbr.rel (%p188) target = $region28
        $region27: #{tpu_custom_call.1} parent=11 // pred_region
          _
        $region28: #{tpu_custom_call.1} parent=11 // pred_fallthru
          _
      $region12: #{tpu_custom_call.1} parent=5 // pred_fallthru
        _
      %p191 = scmp.lt.s32.totalorder %s18, 2
      // Predicated region
      $region29: #{tpu_custom_call.1} parent=5 // pred_check
        %p192 = pneg %p191
      $region30: #{tpu_custom_call.1} parent=5 // pred_check_branch
        %194 = sbr.rel (%p192) target = $region32
      $region31: #{tpu_custom_call.1} parent=5 // pred_region
        // Predicated region
        $region33: #{tpu_custom_call.1} parent=31 // pred_check
          %p195 = pneg %p38
        $region34: #{tpu_custom_call.1} parent=31 // pred_check_branch
          %197 = sbr.rel (%p195) target = $region36
        $region35: #{tpu_custom_call.1} parent=31 // pred_region
          %s198 = sand.u32 %s28, 1
          %s199 = scalar_lea.sflag [#allocation3], %s198
          %s200 = sand.u32 %s28, 1
          %s201 = smul.addr %s200, 8
          %s202 = scalar_lea.vmem [#allocation2], %s201
          %s204 = ssub.s32 128, 128
          %205 = vsyncadd %s199, %s204
          %s206 = smul.addr %s18, 128
          %s207 = scalar_lea.hbm %s0, %s206
          %s209 = sshll.u32 %s202, 4
          %s210 = int_to_ptr.vmem [resolvable:$true] %s209
          %212 = dma.hbm_to_vmem [thread:$0]  %s207, 128, %s210, %s199
        $region36: #{tpu_custom_call.1} parent=31 // pred_fallthru
          _
      $region32: #{tpu_custom_call.1} parent=5 // pred_fallthru
        _
      %p213 = scmp.le.s32.totalorder 1, %s18
      %p214 = scmp.lt.s32.totalorder %s18, 3
      %p215 = pnand %p213, %p214
      %p216 = pneg %p215
      // Predicated region
      $region37: #{tpu_custom_call.1} parent=5 // pred_check
        _
      $region38: #{tpu_custom_call.1} parent=5 // pred_check_branch
        %218 = sbr.rel (%p215) target = $region40
      $region39: #{tpu_custom_call.1} parent=5 // pred_region
        %s219 = ssub.s32 %s18, 1
        %s220 = sand.u32 %s31, 1
        %s221 = scalar_lea.sflag [#allocation3], %s220
        %s222 = sand.u32 %s31, 1
        %s223 = smul.addr %s222, 8
        %s224 = scalar_lea.vmem [#allocation2], %s223
        // Predicated region
        $region41: #{tpu_custom_call.1} parent=39 // pred_check
          %p225 = pneg %p44
        $region42: #{tpu_custom_call.1} parent=39 // pred_check_branch
          %227 = sbr.rel (%p225) target = $region44
        $region43: #{tpu_custom_call.1} parent=39 // pred_region
          %228 = dma.done %s221, 128
        $region44: #{tpu_custom_call.1} parent=39 // pred_fallthru
          _
        // Predicated region
        $region45: #{tpu_custom_call.1} parent=39 // pred_check
          %p229 = pneg %p65
        $region46: #{tpu_custom_call.1} parent=39 // pred_check_branch
          %231 = sbr.rel (%p229) target = $region48
        $region47: #{tpu_custom_call.1} parent=39 // pred_region
          %232 = dma.done [#allocation6], 512
        $region48: #{tpu_custom_call.1} parent=39 // pred_fallthru
          _
        %s233 = sand.u32 %s31, 1
        %s234 = scalar_lea.sflag [#allocation3], %s233
        %s235 = sand.u32 %s31, 1
        %s236 = smul.addr %s235, 8
        %s237 = scalar_lea.vmem [#allocation2], %s236
        %p238 = pneg %p44
        %p239 = pneg %p41
        %p240 = pneg %p65
        %p241 = pneg %p62
        %p242 = pneg %p86
        %p243 = pneg %p83
        %p244 = pneg %p107
        %p245 = pneg %p104
        %p246 = pneg %p128
        %p247 = pneg %p125
        %p248 = pneg %p154
        %p249 = pneg %p151
        %s250 = sand.u32 %s141, 1
        %s251 = scalar_lea.sflag [#allocation4], %s250
        %s252 = sand.u32 %s141, 1
        %s253 = smul.addr %s252, 8
        %s254 = scalar_lea.vmem [#allocation7], %s253
        %v255 = vld [vmem:[%s224] sm:$0xff]
        %v256 = vld [vmem:[#allocation5] sm:$0xff]
        %v257 = vld [vmem:[#allocation5 + $0x8] sm:$0xff]
        %v258 = vld [vmem:[#allocation5 + $0x10] sm:$0xff]
        %v259 = vld [vmem:[#allocation5 + $0x18] sm:$0xff]
        %v260 = vld [vmem:[%s2] sm:$0x1]
        %v262 = vlaneseq
        %v263 = vshrl.u32 %v262, 7
        %v264 = vsub.s32 0, %v263
        %v265 = vrot.slane %v260, %v264
        %vm267 = vcmask 261120
        %v269 = vsel %vm267, %v255, 0
        %271 = vmatprep.subr.mxu0 0.0
        %272 = vmatpush1.msra.mxu0 %v256
        %273 = vmatprep.subr.mxu0 0.0
        %274 = vmatpush1.msra.mxu0 %v257
        %275 = vmatprep.subr.mxu0 0.0
        %276 = vmatpush1.msra.mxu0 %v258
        %277 = vmatprep.subr.mxu0 0.0
        %278 = vmatpush1.msra.mxu0 %v259
        %279 = vmatprep.subr.mxu0 0.0
        %280 = vmatpush1.msra.mxu0 0.0
        %281 = vmatprep.subr.mxu0 0.0
        %282 = vmatpush1.msra.mxu0 0.0
        %283 = vmatprep.subr.mxu0 0.0
        %284 = vmatpush1.msra.mxu0 0.0
        %285 = vmatprep.subr.mxu0 0.0
        %286 = vmatpush1.msra.mxu0 0.0
        %287 = vmatprep.subr.mxu0 0.0
        %288 = vmatpush1.msra.mxu0 0.0
        %289 = vmatprep.subr.mxu0 0.0
        %290 = vmatpush1.msra.mxu0 0.0
        %291 = vmatprep.subr.mxu0 0.0
        %292 = vmatpush1.msra.mxu0 0.0
        %293 = vmatprep.subr.mxu0 0.0
        %294 = vmatpush1.msra.mxu0 0.0
        %295 = vmatprep.subr.mxu0 0.0
        %296 = vmatpush1.msra.mxu0 0.0
        %297 = vmatprep.subr.mxu0 0.0
        %298 = vmatpush1.msra.mxu0 0.0
        %299 = vmatprep.subr.mxu0 0.0
        %300 = vmatpush1.msra.mxu0 0.0
        %301 = vmatprep.subr.mxu0 0.0
        %302 = vmatpush1.msra.mxu0 0.0
        %303 = vmatprep.subr.mxu0 0.0
        %304 = vmatpush1.msra.mxu0 0.0
        %305 = vmatprep.subr.mxu0 0.0
        %306 = vmatpush1.msra.mxu0 0.0
        %307 = vmatprep.subr.mxu0 0.0
        %308 = vmatpush1.msra.mxu0 0.0
        %309 = vmatprep.subr.mxu0 0.0
        %310 = vmatpush1.msra.mxu0 0.0
        %311 = vmatprep.subr.mxu0 0.0
        %312 = vmatpush1.msra.mxu0 0.0
        %313 = vmatprep.subr.mxu0 0.0
        %314 = vmatpush1.msra.mxu0 0.0
        %315 = vmatprep.subr.mxu0 0.0
        %316 = vmatpush1.msra.mxu0 0.0
        %317 = vmatprep.subr.mxu0 0.0
        %318 = vmatpush1.msra.mxu0 0.0
        %319 = vmatprep.subr.mxu0 0.0
        %320 = vmatpush1.msra.mxu0 0.0
        %321 = vmatprep.subr.mxu0 0.0
        %322 = vmatpush1.msra.mxu0 0.0
        %323 = vmatprep.subr.mxu0 0.0
        %324 = vmatpush1.msra.mxu0 0.0
        %325 = vmatprep.subr.mxu0 0.0
        %326 = vmatpush1.msra.mxu0 0.0
        %327 = vmatprep.subr.mxu0 0.0
        %328 = vmatpush1.msra.mxu0 0.0
        %329 = vmatprep.subr.mxu0 0.0
        %330 = vmatpush1.msra.mxu0 0.0
        %331 = vmatprep.subr.mxu0 0.0
        %332 = vmatpush1.msra.mxu0 0.0
        %333 = vmatprep.subr.mxu0 0.0
        %334 = vmatpush1.msra.mxu0 0.0
        %335 = vmatprep.mubr.f32.mxu0 0.0
        %336 = vmatmul.mubr.f32.gmra.mrb[0].mxu0 %v269
        %v337 = vpop.f32.mrb[0].mxu0
        %v338 = vadd.f32 %v265, %v337
        %v339 = vpop.f32.mrb[0].mxu0
        %340 = vdwg.mxu0
        %v341 = vmul.f32 %v338, 0.5
        %v342 = vmul.f32 %v338, 0.044715
        %v343 = vmul.f32 %v342, %v338
        %v344 = vmul.f32 %v343, %v338
        %v345 = vadd.f32 %v338, %v344
        %v346 = vmul.f32 %v345, 0.7978846
        %v347 = vtanh.pop %v346
        %v348 = vadd.f32 %v347, 1.0
        %v349 = vmul.f32 %v341, %v348
        %v350 = vld [vmem:[%s3] sm:$0x1]
        %v351 = vld [vmem:[%s4] sm:$0x1]
        %v352 = vsel %vm267, %v349, 0.0
        %353 = vadd.xlane.f32.xlu0 %v352
        %v354 = vpop.xlane.xlu0 %353
        %v355 = vmul.f32 %v354, 0.03125
        %v356 = vsub.f32 %v349, %v355
        %v357 = vmul.f32 %v356, %v356
        %v358 = vsel %vm267, %v357, 0.0
        %359 = vadd.xlane.f32.xlu0 %v358
        %v360 = vpop.xlane.xlu0 %359
        %v361 = vmul.f32 %v360, 0.03125
        %v362 = vadd.f32 %v361, 1e-12
        %v363 = vrsqrt.pop %v362
        %v365 = vlaneseq
        %v366 = vshrl.u32 %v365, 7
        %v367 = vsub.s32 0, %v366
        %v368 = vrot.slane %v350, %v367
        %v370 = vmul.f32 %v363, %v368
        %v371 = vmul.f32 %v349, %v370
        %v372 = vmul.f32 %v355, %v370
        %v374 = vlaneseq
        %v375 = vshrl.u32 %v374, 7
        %v376 = vsub.s32 0, %v375
        %v377 = vrot.slane %v351, %v376
        %v379 = vsub.f32 %v377, %v372
        %v380 = vadd.f32 %v371, %v379
        %381 = vst.msk [vmem:[%s254] sm:$0xff] %vm267, %v380
        %s382 = sand.u32 %s141, 1
        %s383 = scalar_lea.sflag [#allocation4], %s382
        %s384 = sand.u32 %s141, 1
        %s385 = smul.addr %s384, 8
        %s386 = scalar_lea.vmem [#allocation7], %s385
        // Predicated region
        $region49: #{tpu_custom_call.1} parent=39 // pred_check
          %p387 = pneg %p151
        $region50: #{tpu_custom_call.1} parent=39 // pred_check_branch
          %389 = sbr.rel (%p387) target = $region52
        $region51: #{tpu_custom_call.1} parent=39 // pred_region
          %s391 = ssub.s32 128, 128
          %392 = vsyncadd %s383, %s391
          %s393 = smul.addr %s23, 128
          %s394 = scalar_lea.hbm %s5, %s393
          %s396 = sshll.u32 %s386, 4
          %s397 = int_to_ptr.vmem [resolvable:$true] %s396
          %399 = dma.vmem_to_hbm [thread:$0]  %s397, 128, %s394, %s383
        $region52: #{tpu_custom_call.1} parent=39 // pred_fallthru
          _
      $region40: #{tpu_custom_call.1} parent=5 // pred_fallthru
        _
      %p400 = scmp.le.s32.totalorder 2, %s18
      // Predicated region
      $region53: #{tpu_custom_call.1} parent=5 // pred_check
        %p401 = pneg %p400
      $region54: #{tpu_custom_call.1} parent=5 // pred_check_branch
        %403 = sbr.rel (%p401) target = $region56
      $region55: #{tpu_custom_call.1} parent=5 // pred_region
        %s404 = ssub.s32 %s18, 2
        // Predicated region
        $region57: #{tpu_custom_call.1} parent=55 // pred_check
          %p405 = pneg %p157
        $region58: #{tpu_custom_call.1} parent=55 // pred_check_branch
          %407 = sbr.rel (%p405) target = $region60
        $region59: #{tpu_custom_call.1} parent=55 // pred_region
          %s408 = sand.u32 %s142, 1
          %s409 = scalar_lea.sflag [#allocation4], %s408
          %s410 = sand.u32 %s142, 1
          %s411 = smul.addr %s410, 8
          %s412 = scalar_lea.vmem [#allocation7], %s411
          %413 = dma.done %s409, 128
        $region60: #{tpu_custom_call.1} parent=55 // pred_fallthru
          _
      $region56: #{tpu_custom_call.1} parent=5 // pred_fallthru
        _
    $region6: #{tpu_custom_call.1} parent=1 // loop_footer
      %s22 = sadd.s32 1, %s18
    $region7: #{tpu_custom_call.1} parent=1 // loop_footer_branch
      %17 = sbr.rel target = $region3
    $region8: #{tpu_custom_call.1} parent=1 // loop_exit
      _
    %414 = vsyncpa [#allocation3], 1
    %s415 = scalar_lea.sflag [#allocation3], 1
    %416 = vsyncpa %s415, 1
    %417 = vsyncpa [#allocation6], 1
    %418 = vsyncpa [#allocation4], 1
    %s419 = scalar_lea.sflag [#allocation4], 1
    %420 = vsyncpa %s419, 1

</llo_original>
